<compile_context>
chip_gen: v5e
topology: v5e:2x2
jax: 0.10.0
libtpu: 0.0.40
codegen_flags: <defaults>
</compile_context>

<pallas_src>
import jax
import jax.numpy as jnp
from jax import lax
from jax.experimental import pallas as pl
from jax.experimental.pallas import tpu as pltpu


# ---------------------------------------------------------------------------
# Kernel
# ---------------------------------------------------------------------------
def _embedding_head_kernel(h0_ref, h1_ref, w_ref, b_ref, o_ref,
                           dot_acc, n0_acc, n1_acc):
    """One (batch-tile, E-tile) step of linear + cosine similarity."""
    j = pl.program_id(1)                         # E (feature) chunk index

    @pl.when(j == 0)
    def _init():
        dot_acc[...] = jnp.zeros_like(dot_acc)
        n0_acc[...] = jnp.zeros_like(n0_acc)
        n1_acc[...] = jnp.zeros_like(n1_acc)

    w = w_ref[...]                               # (D, tile_e), compute dtype
    b = b_ref[...].astype(jnp.float32)           # (1, tile_e)
    # Activations arrive f32; cast to the weight dtype right before the MXU
    # (VPU cast hidden under the matmul; avoids an extra HBM pass upstream).
    h0 = h0_ref[...].astype(w.dtype)
    h1 = h1_ref[...].astype(w.dtype)

    # Two matmuls against the same resident weight tile (no concat copy).
    z0 = jnp.dot(h0, w, preferred_element_type=jnp.float32) + b
    z1 = jnp.dot(h1, w, preferred_element_type=jnp.float32) + b

    # Partial cosine-similarity reductions for this E chunk (f32; keepdims
    # keeps the sublane layout -> cheap (tile_b, 1) accumulators, no relayout).
    dot_acc[...] += jnp.sum(z0 * z1, axis=-1, keepdims=True)
    n0_acc[...] += jnp.sum(z0 * z0, axis=-1, keepdims=True)
    n1_acc[...] += jnp.sum(z1 * z1, axis=-1, keepdims=True)

    @pl.when(j == pl.num_programs(1) - 1)
    def _finalize():
        # cos = dot / sqrt(max(||z0||^2 * ||z1||^2, eps^2)); matches
        # F.cosine_similarity(eps=1e-12) for all non-degenerate inputs.
        eps2 = jnp.float32(1e-24)
        sim = dot_acc[...] * lax.rsqrt(jnp.maximum(n0_acc[...] * n1_acc[...],
                                                   eps2))
        o_ref[...] = sim.astype(o_ref.dtype)


# ---------------------------------------------------------------------------
# One-time parameter prep
# ---------------------------------------------------------------------------
def prepare_linear_params(weight, bias, *, compute_dtype=jnp.float32):
    """One-time layout/dtype prep for nn.Linear params.

    weight: (E, D) -> transposed to (D, E) and cast ONCE to compute_dtype
            (jnp.bfloat16 halves weight HBM traffic / VMEM residency; the
            matmul still accumulates in f32 -> logits tolerance ~1e-2).
    bias:   (E,)   -> (1, E) f32 row.
    """
    w_t = jnp.asarray(weight).astype(compute_dtype).T      # (D, E)
    b2d = jnp.asarray(bias, jnp.float32).reshape(1, -1)    # (1, E)
    return w_t, b2d


# ---------------------------------------------------------------------------
# Tiling / VMEM planning
# ---------------------------------------------------------------------------
def _round_up(x, m):
    return -(-x // m) * m


def _device_vmem_bytes():
    try:
        return int(pltpu.get_tpu_info().vmem_capacity_bytes)
    except Exception:
        return 64 * 1024 * 1024          # conservative: v7x per-TensorCore VMEM


def _plan_tiles(B, D, E, w_itemsize, h_itemsize, vmem_budget, tile_e_override):
    # ---- E (output-feature) tiling: stream the weight when it is too big.
    if tile_e_override is not None:
        if E % tile_e_override:
            raise ValueError("tile_e_override must divide E")
        tile_e = tile_e_override
    else:
        tile_e = E

        def w_block_bytes(te):
            bufs = 1 if te == E else 2          # streamed chunks double-buffer
            return bufs * D * te * w_itemsize

        # Halve while the weight block hogs more than half the budget; only
        # legal while the result stays a multiple of 128 lanes (divides E).
        while w_block_bytes(tile_e) > vmem_budget // 2 and tile_e % 256 == 0:
            tile_e //= 2
    num_e = E // tile_e
    w_bufs = 1 if num_e == 1 else 2

    # ---- batch tiling.
    def footprint(tb):
        inputs = 2 * 2 * tb * D * h_itemsize                 # h0+h1, dbl-buf
        weight = w_bufs * (D * tile_e * w_itemsize + tile_e * 4)
        interm = 4 * tb * tile_e * 4 + 2 * tb * D * w_itemsize
        accs = 3 * tb * 4
        outs = 2 * tb * 4
        return inputs + weight + interm + accs + outs

    cap_b = 1024 if vmem_budget >= (48 << 20) else 512        # v5e/v6e vs v7x
    tile_b = min(_round_up(B, 8), cap_b)
    while tile_b > 8 and footprint(tile_b) > vmem_budget:
        tile_b = max(8, _round_up(tile_b // 2, 8))

    # Give the "parallel" batch axis >= 2 steps when possible so both v7x
    # TensorCores participate (one extra ~0.35us step elsewhere is noise).
    padded_b8 = _round_up(B, 8)
    if padded_b8 >= 16 and padded_b8 <= tile_b:
        tile_b = _round_up(-(-padded_b8 // 2), 8)

    num_b = -(-B // tile_b)
    return tile_b, num_b, tile_e, num_e, footprint(tile_b)


# ---------------------------------------------------------------------------
# Forward wrapper
# ---------------------------------------------------------------------------
def embedding_head_forward(h0, h1, mask, w_t, b2d, *, tile_e_override=None):
    """Pallas EmbeddingHead inference (sentsim_func='sim' path).

    h0, h1 : (B, D) float   -- the two pooled sentence representations
    mask   : (B, S) int32   -- attention mask (only feeds pool_idx, unused)
    w_t    : (D, E)         -- pre-transposed / pre-cast nn.Linear weight
    b2d    : (1, E) float32 -- nn.Linear bias row
    returns: (B, 1) float32 cosine-similarity logits (num_lbs == 1)
    """
    B, D = h0.shape
    E = w_t.shape[1]

    # pool_idx = mask.sum(1): computed for parity with the module, unused on
    # the returned-logits path.
    _pool_idx = jnp.sum(mask, axis=1)

    w_itemsize = jnp.dtype(w_t.dtype).itemsize
    h_itemsize = jnp.dtype(h0.dtype).itemsize
    vmem_cap = _device_vmem_bytes()
    vmem_budget = int(vmem_cap * 0.55)

    tile_b, num_b, tile_e, num_e, est_bytes = _plan_tiles(
        B, D, E, w_itemsize, h_itemsize, vmem_budget, tile_e_override)

    padded_B = num_b * tile_b
    if padded_B != B:
        pad = ((0, padded_B - B), (0, 0))
        h0p = jnp.pad(h0, pad)        # zero rows -> sim == 0, sliced off below
        h1p = jnp.pad(h1, pad)
    else:
        h0p, h1p = h0, h1

    # Clamp the scoped VMEM limit to the physical per-core VMEM (headroom 2MiB).
    vmem_limit = int(min(max(32 << 20, 2 * est_bytes + (2 << 20)),
                         vmem_cap - (2 << 20)))

    cost = pl.CostEstimate(
        flops=4 * B * D * E + 8 * B * E,
        transcendentals=0,
        bytes_accessed=(D * E * w_itemsize + E * 4
                        + 2 * padded_B * D * h_itemsize + padded_B * 4))

    def _run(single_buffer_weight):
        const_kwargs = (dict(pipeline_mode=pl.Buffered(1))
                        if single_buffer_weight else {})
        grid_spec = pltpu.PrefetchScalarGridSpec(
            num_scalar_prefetch=0,
            grid=(num_b, num_e),                    # E (reduction) axis last
            in_specs=[
                pl.BlockSpec((tile_b, D), lambda i, j: (i, 0)),
                pl.BlockSpec((tile_b, D), lambda i, j: (i, 0)),
                pl.BlockSpec((D, tile_e), lambda i, j: (0, j), **const_kwargs),
                pl.BlockSpec((1, tile_e), lambda i, j: (0, j), **const_kwargs),
            ],
            out_specs=pl.BlockSpec((tile_b, 1), lambda i, j: (i, 0)),
            scratch_shapes=[pltpu.VMEM((tile_b, 1), jnp.float32)] * 3,
        )
        return pl.pallas_call(
            _embedding_head_kernel,
            out_shape=jax.ShapeDtypeStruct((padded_B, 1), jnp.float32),
            grid_spec=grid_spec,
            compiler_params=pltpu.CompilerParams(
                dimension_semantics=("parallel", "arbitrary"),
                vmem_limit_bytes=vmem_limit),
            cost_estimate=cost,
        )(h0p, h1p, w_t, b2d)

    # Single-buffer the (constant-index) weight/bias when E is not tiled;
    # fall back to default double-buffering if pipeline_mode is unsupported.
    if num_e == 1 and hasattr(pl, "Buffered"):
        try:
            out = _run(True)
        except Exception:
            out = _run(False)
    else:
        out = _run(False)

    # clf_logits.view(-1, num_lbs) with num_lbs == 1 -> (B, 1).
    return out[:B]


# ---------------------------------------------------------------------------
# Reference + self-test
# ---------------------------------------------------------------------------
def _reference(h0, h1, weight, bias):
    z0 = h0 @ weight.T + bias
    z1 = h1 @ weight.T + bias
    eps = 1e-12
    dot = jnp.sum(z0 * z1, axis=-1)
    n0 = jnp.maximum(jnp.linalg.norm(z0, axis=-1), eps)
    n1 = jnp.maximum(jnp.linalg.norm(z1, axis=-1), eps)
    return (dot / (n0 * n1)).reshape(-1, 1)


def _run_case(key, B, S, D, E, *, compute_dtype, tile_e_override, atol):
    k0, k1, k2, k3 = jax.random.split(key, 4)
    h0 = jax.random.normal(k0, (B, D), dtype=jnp.float32)
    h1 = jax.random.normal(k1, (B, D), dtype=jnp.float32)
    weight = jax.random.normal(k2, (E, D), dtype=jnp.float32) * 0.1
    bias = jax.random.normal(k3, (E,), dtype=jnp.float32) * 0.01
    mask = jnp.ones((B, S), dtype=jnp.int32)

    w_t, b2d = prepare_linear_params(weight, bias, compute_dtype=compute_dtype)
    out = embedding_head_forward(h0, h1, mask, w_t, b2d,
                                 tile_e_override=tile_e_override)
    out = jax.block_until_ready(out)

    ref = _reference(h0, h1, weight, bias)
    assert out.shape == (B, 1), (out.shape, (B, 1))
    assert jnp.allclose(out, ref, atol=atol, rtol=atol), (out, ref)
    return out


if __name__ == "__main__":
    key = jax.random.PRNGKey(0)
    ka, kb, kc = jax.random.split(key, 3)

    # 1) Tiny f32 case: single batch tile, single E tile, single-buffer weight.
    _run_case(ka, B=8, S=16, D=32, E=32,
              compute_dtype=jnp.float32, tile_e_override=None, atol=1e-5)

    # 2) Ragged batch (padding) + >=2 parallel batch tiles + bf16 weight
    #    (bf16 rounds the MXU operands; accumulation is f32 -> loose tol).
    _run_case(kb, B=24, S=16, D=64, E=128,
              compute_dtype=jnp.bfloat16, tile_e_override=None, atol=3e-2)

    # 3) E-tiled path: weight streamed in (D, 128) chunks with accumulators.
    _run_case(kc, B=16, S=16, D=128, E=256,
              compute_dtype=jnp.float32, tile_e_override=128, atol=1e-4)

    print("KERNEL_OK")
</pallas_src>

<mosaic_0001>
module attributes {stable_mosaic.version = 11 : i64} {
  func.func @_embedding_head_kernel(%arg0: i32, %arg1: i32, %arg2: memref<8x32xf32, #tpu.memory_space<vmem>>, %arg3: memref<8x32xf32, #tpu.memory_space<vmem>>, %arg4: memref<32x32xf32, #tpu.memory_space<vmem>>, %arg5: memref<1x32xf32, #tpu.memory_space<vmem>>, %arg6: memref<8x1xf32, #tpu.memory_space<vmem>>, %arg7: memref<8x1xf32, #tpu.memory_space<vmem>>, %arg8: memref<8x1xf32, #tpu.memory_space<vmem>>, %arg9: memref<8x1xf32, #tpu.memory_space<vmem>>) attributes {dimension_semantics = [#tpu.dimension_semantics<parallel>, #tpu.dimension_semantics<arbitrary>], iteration_bounds = array<i64: 1, 1>, scalar_prefetch = 0 : i64, scratch_operands = 3 : i64, tpu.core_type = #tpu.core_type<tc>, window_params = [{transform_indices = @transform_0, window_bounds = array<i64: 8, 32>}, {transform_indices = @transform_1, window_bounds = array<i64: 8, 32>}, {pipeline_mode = #tpu.pipeline_mode<synchronous>, transform_indices = @transform_2, window_bounds = array<i64: 32, 32>}, {pipeline_mode = #tpu.pipeline_mode<synchronous>, transform_indices = @transform_3, window_bounds = array<i64: 1, 32>}, {transform_indices = @transform_4, window_bounds = array<i64: 8, 1>}]} {
    %c0_i32 = arith.constant 0 : i32
    %0 = arith.cmpi eq, %arg1, %c0_i32 : i32
    %1 = arith.extui %0 : i1 to i32
    %c0_i32_0 = arith.constant 0 : i32
    %2 = arith.cmpi ne, %1, %c0_i32_0 : i32
    scf.if %2 {
      %cst_26 = arith.constant 0.000000e+00 : f32
      %34 = vector.broadcast %cst_26 : f32 to vector<8x1xf32>
      %c0_27 = arith.constant 0 : index
      %c0_28 = arith.constant 0 : index
      %35 = vector.load %arg7[%c0_27, %c0_28] : memref<8x1xf32, #tpu.memory_space<vmem>>, vector<8x1xf32>
      tpu.vector_store %arg7[%c0_27, %c0_28], %34 {strides = array<i32>} : memref<8x1xf32, #tpu.memory_space<vmem>>, vector<8x1xf32>,
      %cst_29 = arith.constant 0.000000e+00 : f32
      %36 = vector.broadcast %cst_29 : f32 to vector<8x1xf32>
      %c0_30 = arith.constant 0 : index
      %c0_31 = arith.constant 0 : index
      %37 = vector.load %arg8[%c0_30, %c0_31] : memref<8x1xf32, #tpu.memory_space<vmem>>, vector<8x1xf32>
      tpu.vector_store %arg8[%c0_30, %c0_31], %36 {strides = array<i32>} : memref<8x1xf32, #tpu.memory_space<vmem>>, vector<8x1xf32>,
      %cst_32 = arith.constant 0.000000e+00 : f32
      %38 = vector.broadcast %cst_32 : f32 to vector<8x1xf32>
      %c0_33 = arith.constant 0 : index
      %c0_34 = arith.constant 0 : index
      %39 = vector.load %arg9[%c0_33, %c0_34] : memref<8x1xf32, #tpu.memory_space<vmem>>, vector<8x1xf32>
      tpu.vector_store %arg9[%c0_33, %c0_34], %38 {strides = array<i32>} : memref<8x1xf32, #tpu.memory_space<vmem>>, vector<8x1xf32>,
    } else {
    }
    %c0 = arith.constant 0 : index
    %c0_1 = arith.constant 0 : index
    %3 = vector.load %arg4[%c0, %c0_1] : memref<32x32xf32, #tpu.memory_space<vmem>>, vector<32x32xf32>
    %c0_2 = arith.constant 0 : index
    %c0_3 = arith.constant 0 : index
    %4 = vector.load %arg5[%c0_2, %c0_3] : memref<1x32xf32, #tpu.memory_space<vmem>>, vector<1x32xf32>
    %c0_4 = arith.constant 0 : index
    %c0_5 = arith.constant 0 : index
    %5 = vector.load %arg2[%c0_4, %c0_5] : memref<8x32xf32, #tpu.memory_space<vmem>>, vector<8x32xf32>
    %c0_6 = arith.constant 0 : index
    %c0_7 = arith.constant 0 : index
    %6 = vector.load %arg3[%c0_6, %c0_7] : memref<8x32xf32, #tpu.memory_space<vmem>>, vector<8x32xf32>
    %cst = arith.constant dense<0.000000e+00> : vector<8x32xf32>
    %7 = tpu.matmul %5, %3, %cst {dimension_numbers = #tpu.dot_dimension_numbers<[1], [0], [0], [1], [0, 0, 1, 1], [], []>} : vector<8x32xf32>, vector<32x32xf32>, vector<8x32xf32> -> vector<8x32xf32>
    %8 = vector.broadcast %4 : vector<1x32xf32> to vector<8x32xf32>
    %9 = arith.addf %7, %8 : vector<8x32xf32>
    %cst_8 = arith.constant dense<0.000000e+00> : vector<8x32xf32>
    %10 = tpu.matmul %6, %3, %cst_8 {dimension_numbers = #tpu.dot_dimension_numbers<[1], [0], [0], [1], [0, 0, 1, 1], [], []>} : vector<8x32xf32>, vector<32x32xf32>, vector<8x32xf32> -> vector<8x32xf32>
    %11 = vector.broadcast %4 : vector<1x32xf32> to vector<8x32xf32>
    %12 = arith.addf %10, %11 : vector<8x32xf32>
    %c0_9 = arith.constant 0 : index
    %c0_10 = arith.constant 0 : index
    %13 = vector.load %arg7[%c0_9, %c0_10] : memref<8x1xf32, #tpu.memory_space<vmem>>, vector<8x1xf32>
    %14 = arith.mulf %9, %12 : vector<8x32xf32>
    %cst_11 = arith.constant dense<0.000000e+00> : vector<8xf32>
    %15 = vector.multi_reduction <add>, %14, %cst_11 [1] : vector<8x32xf32> to vector<8xf32>
    %16 = vector.shape_cast %15 : vector<8xf32> to vector<8x1xf32>
    %17 = arith.addf %13, %16 : vector<8x1xf32>
    %c0_12 = arith.constant 0 : index
    %c0_13 = arith.constant 0 : index
    %18 = vector.load %arg7[%c0_12, %c0_13] : memref<8x1xf32, #tpu.memory_space<vmem>>, vector<8x1xf32>
    tpu.vector_store %arg7[%c0_12, %c0_13], %17 {strides = array<i32>} : memref<8x1xf32, #tpu.memory_space<vmem>>, vector<8x1xf32>,
    %c0_14 = arith.constant 0 : index
    %c0_15 = arith.constant 0 : index
    %19 = vector.load %arg8[%c0_14, %c0_15] : memref<8x1xf32, #tpu.memory_space<vmem>>, vector<8x1xf32>
    %20 = arith.mulf %9, %9 : vector<8x32xf32>
    %cst_16 = arith.constant dense<0.000000e+00> : vector<8xf32>
    %21 = vector.multi_reduction <add>, %20, %cst_16 [1] : vector<8x32xf32> to vector<8xf32>
    %22 = vector.shape_cast %21 : vector<8xf32> to vector<8x1xf32>
    %23 = arith.addf %19, %22 : vector<8x1xf32>
    %c0_17 = arith.constant 0 : index
    %c0_18 = arith.constant 0 : index
    %24 = vector.load %arg8[%c0_17, %c0_18] : memref<8x1xf32, #tpu.memory_space<vmem>>, vector<8x1xf32>
    tpu.vector_store %arg8[%c0_17, %c0_18], %23 {strides = array<i32>} : memref<8x1xf32, #tpu.memory_space<vmem>>, vector<8x1xf32>,
    %c0_19 = arith.constant 0 : index
    %c0_20 = arith.constant 0 : index
    %25 = vector.load %arg9[%c0_19, %c0_20] : memref<8x1xf32, #tpu.memory_space<vmem>>, vector<8x1xf32>
    %26 = arith.mulf %12, %12 : vector<8x32xf32>
    %cst_21 = arith.constant dense<0.000000e+00> : vector<8xf32>
    %27 = vector.multi_reduction <add>, %26, %cst_21 [1] : vector<8x32xf32> to vector<8xf32>
    %28 = vector.shape_cast %27 : vector<8xf32> to vector<8x1xf32>
    %29 = arith.addf %25, %28 : vector<8x1xf32>
    %c0_22 = arith.constant 0 : index
    %c0_23 = arith.constant 0 : index
    %30 = vector.load %arg9[%c0_22, %c0_23] : memref<8x1xf32, #tpu.memory_space<vmem>>, vector<8x1xf32>
    tpu.vector_store %arg9[%c0_22, %c0_23], %29 {strides = array<i32>} : memref<8x1xf32, #tpu.memory_space<vmem>>, vector<8x1xf32>,
    %c0_i32_24 = arith.constant 0 : i32
    %31 = arith.cmpi eq, %arg1, %c0_i32_24 : i32
    %32 = arith.extui %31 : i1 to i32
    %c0_i32_25 = arith.constant 0 : i32
    %33 = arith.cmpi ne, %32, %c0_i32_25 : i32
    scf.if %33 {
      %c0_26 = arith.constant 0 : index
      %c0_27 = arith.constant 0 : index
      %34 = vector.load %arg7[%c0_26, %c0_27] : memref<8x1xf32, #tpu.memory_space<vmem>>, vector<8x1xf32>
      %c0_28 = arith.constant 0 : index
      %c0_29 = arith.constant 0 : index
      %35 = vector.load %arg8[%c0_28, %c0_29] : memref<8x1xf32, #tpu.memory_space<vmem>>, vector<8x1xf32>
      %c0_30 = arith.constant 0 : index
      %c0_31 = arith.constant 0 : index
      %36 = vector.load %arg9[%c0_30, %c0_31] : memref<8x1xf32, #tpu.memory_space<vmem>>, vector<8x1xf32>
      %37 = arith.mulf %35, %36 : vector<8x1xf32>
      %cst_32 = arith.constant 1.000000e-24 : f32
      %38 = vector.broadcast %cst_32 : f32 to vector<8x1xf32>
      %39 = arith.maximumf %37, %38 : vector<8x1xf32>
      %40 = math.rsqrt %39 : vector<8x1xf32>
      %41 = arith.mulf %34, %40 : vector<8x1xf32>
      %c0_33 = arith.constant 0 : index
      %c0_34 = arith.constant 0 : index
      %42 = vector.load %arg6[%c0_33, %c0_34] : memref<8x1xf32, #tpu.memory_space<vmem>>, vector<8x1xf32>
      tpu.vector_store %arg6[%c0_33, %c0_34], %41 {strides = array<i32>} : memref<8x1xf32, #tpu.memory_space<vmem>>, vector<8x1xf32>,
    } else {
    }
    return
  }
  func.func @transform_0(%arg0: i32, %arg1: i32) -> (i32, i32) {
    %c0_i32 = arith.constant 0 : i32
    %c0_i32_0 = arith.constant 0 : i32
    return %arg0, %c0_i32 : i32, i32
  }
  func.func @transform_1(%arg0: i32, %arg1: i32) -> (i32, i32) {
    %c0_i32 = arith.constant 0 : i32
    %c0_i32_0 = arith.constant 0 : i32
    return %arg0, %c0_i32 : i32, i32
  }
  func.func @transform_2(%arg0: i32, %arg1: i32) -> (i32, i32) {
    %c0_i32 = arith.constant 0 : i32
    %c0_i32_0 = arith.constant 0 : i32
    return %c0_i32, %arg1 : i32, i32
  }
  func.func @transform_3(%arg0: i32, %arg1: i32) -> (i32, i32) {
    %c0_i32 = arith.constant 0 : i32
    %c0_i32_0 = arith.constant 0 : i32
    return %c0_i32, %arg1 : i32, i32
  }
  func.func @transform_4(%arg0: i32, %arg1: i32) -> (i32, i32) {
    %c0_i32 = arith.constant 0 : i32
    %c0_i32_0 = arith.constant 0 : i32
    return %arg0, %c0_i32 : i32, i32
  }
}

module attributes {stable_mosaic.version = 11 : i64} {
  func.func @_embedding_head_kernel(%arg0: i32, %arg1: i32, %arg2: memref<8x32xf32, #tpu.memory_space<vmem>>, %arg3: memref<8x32xf32, #tpu.memory_space<vmem>>, %arg4: memref<32x32xf32, #tpu.memory_space<vmem>>, %arg5: memref<1x32xf32, #tpu.memory_space<vmem>>, %arg6: memref<8x1xf32, #tpu.memory_space<vmem>>, %arg7: memref<8x1xf32, #tpu.memory_space<vmem>>, %arg8: memref<8x1xf32, #tpu.memory_space<vmem>>, %arg9: memref<8x1xf32, #tpu.memory_space<vmem>>) attributes {dimension_semantics = [#tpu.dimension_semantics<parallel>, #tpu.dimension_semantics<arbitrary>], iteration_bounds = array<i64: 1, 1>, scalar_prefetch = 0 : i64, scratch_operands = 3 : i64, tpu.core_type = #tpu.core_type<tc>, window_params = [{transform_indices = @transform_0, window_bounds = array<i64: 8, 32>}, {transform_indices = @transform_1, window_bounds = array<i64: 8, 32>}, {transform_indices = @transform_2, window_bounds = array<i64: 32, 32>}, {transform_indices = @transform_3, window_bounds = array<i64: 1, 32>}, {transform_indices = @transform_4, window_bounds = array<i64: 8, 1>}]} {
    %c0_i32 = arith.constant 0 : i32
    %0 = arith.cmpi eq, %arg1, %c0_i32 : i32
    %1 = arith.extui %0 : i1 to i32
    %c0_i32_0 = arith.constant 0 : i32
    %2 = arith.cmpi ne, %1, %c0_i32_0 : i32
    scf.if %2 {
      %cst_26 = arith.constant 0.000000e+00 : f32
      %34 = vector.broadcast %cst_26 : f32 to vector<8x1xf32>
      %c0_27 = arith.constant 0 : index
      %c0_28 = arith.constant 0 : index
      %35 = vector.load %arg7[%c0_27, %c0_28] : memref<8x1xf32, #tpu.memory_space<vmem>>, vector<8x1xf32>
      tpu.vector_store %arg7[%c0_27, %c0_28], %34 {strides = array<i32>} : memref<8x1xf32, #tpu.memory_space<vmem>>, vector<8x1xf32>,
      %cst_29 = arith.constant 0.000000e+00 : f32
      %36 = vector.broadcast %cst_29 : f32 to vector<8x1xf32>
      %c0_30 = arith.constant 0 : index
      %c0_31 = arith.constant 0 : index
      %37 = vector.load %arg8[%c0_30, %c0_31] : memref<8x1xf32, #tpu.memory_space<vmem>>, vector<8x1xf32>
      tpu.vector_store %arg8[%c0_30, %c0_31], %36 {strides = array<i32>} : memref<8x1xf32, #tpu.memory_space<vmem>>, vector<8x1xf32>,
      %cst_32 = arith.constant 0.000000e+00 : f32
      %38 = vector.broadcast %cst_32 : f32 to vector<8x1xf32>
      %c0_33 = arith.constant 0 : index
      %c0_34 = arith.constant 0 : index
      %39 = vector.load %arg9[%c0_33, %c0_34] : memref<8x1xf32, #tpu.memory_space<vmem>>, vector<8x1xf32>
      tpu.vector_store %arg9[%c0_33, %c0_34], %38 {strides = array<i32>} : memref<8x1xf32, #tpu.memory_space<vmem>>, vector<8x1xf32>,
    } else {
    }
    %c0 = arith.constant 0 : index
    %c0_1 = arith.constant 0 : index
    %3 = vector.load %arg4[%c0, %c0_1] : memref<32x32xf32, #tpu.memory_space<vmem>>, vector<32x32xf32>
    %c0_2 = arith.constant 0 : index
    %c0_3 = arith.constant 0 : index
    %4 = vector.load %arg5[%c0_2, %c0_3] : memref<1x32xf32, #tpu.memory_space<vmem>>, vector<1x32xf32>
    %c0_4 = arith.constant 0 : index
    %c0_5 = arith.constant 0 : index
    %5 = vector.load %arg2[%c0_4, %c0_5] : memref<8x32xf32, #tpu.memory_space<vmem>>, vector<8x32xf32>
    %c0_6 = arith.constant 0 : index
    %c0_7 = arith.constant 0 : index
    %6 = vector.load %arg3[%c0_6, %c0_7] : memref<8x32xf32, #tpu.memory_space<vmem>>, vector<8x32xf32>
    %cst = arith.constant dense<0.000000e+00> : vector<8x32xf32>
    %7 = tpu.matmul %5, %3, %cst {dimension_numbers = #tpu.dot_dimension_numbers<[1], [0], [0], [1], [0, 0, 1, 1], [], []>} : vector<8x32xf32>, vector<32x32xf32>, vector<8x32xf32> -> vector<8x32xf32>
    %8 = vector.broadcast %4 : vector<1x32xf32> to vector<8x32xf32>
    %9 = arith.addf %7, %8 : vector<8x32xf32>
    %cst_8 = arith.constant dense<0.000000e+00> : vector<8x32xf32>
    %10 = tpu.matmul %6, %3, %cst_8 {dimension_numbers = #tpu.dot_dimension_numbers<[1], [0], [0], [1], [0, 0, 1, 1], [], []>} : vector<8x32xf32>, vector<32x32xf32>, vector<8x32xf32> -> vector<8x32xf32>
    %11 = vector.broadcast %4 : vector<1x32xf32> to vector<8x32xf32>
    %12 = arith.addf %10, %11 : vector<8x32xf32>
    %c0_9 = arith.constant 0 : index
    %c0_10 = arith.constant 0 : index
    %13 = vector.load %arg7[%c0_9, %c0_10] : memref<8x1xf32, #tpu.memory_space<vmem>>, vector<8x1xf32>
    %14 = arith.mulf %9, %12 : vector<8x32xf32>
    %cst_11 = arith.constant dense<0.000000e+00> : vector<8xf32>
    %15 = vector.multi_reduction <add>, %14, %cst_11 [1] : vector<8x32xf32> to vector<8xf32>
    %16 = vector.shape_cast %15 : vector<8xf32> to vector<8x1xf32>
    %17 = arith.addf %13, %16 : vector<8x1xf32>
    %c0_12 = arith.constant 0 : index
    %c0_13 = arith.constant 0 : index
    %18 = vector.load %arg7[%c0_12, %c0_13] : memref<8x1xf32, #tpu.memory_space<vmem>>, vector<8x1xf32>
    tpu.vector_store %arg7[%c0_12, %c0_13], %17 {strides = array<i32>} : memref<8x1xf32, #tpu.memory_space<vmem>>, vector<8x1xf32>,
    %c0_14 = arith.constant 0 : index
    %c0_15 = arith.constant 0 : index
    %19 = vector.load %arg8[%c0_14, %c0_15] : memref<8x1xf32, #tpu.memory_space<vmem>>, vector<8x1xf32>
    %20 = arith.mulf %9, %9 : vector<8x32xf32>
    %cst_16 = arith.constant dense<0.000000e+00> : vector<8xf32>
    %21 = vector.multi_reduction <add>, %20, %cst_16 [1] : vector<8x32xf32> to vector<8xf32>
    %22 = vector.shape_cast %21 : vector<8xf32> to vector<8x1xf32>
    %23 = arith.addf %19, %22 : vector<8x1xf32>
    %c0_17 = arith.constant 0 : index
    %c0_18 = arith.constant 0 : index
    %24 = vector.load %arg8[%c0_17, %c0_18] : memref<8x1xf32, #tpu.memory_space<vmem>>, vector<8x1xf32>
    tpu.vector_store %arg8[%c0_17, %c0_18], %23 {strides = array<i32>} : memref<8x1xf32, #tpu.memory_space<vmem>>, vector<8x1xf32>,
    %c0_19 = arith.constant 0 : index
    %c0_20 = arith.constant 0 : index
    %25 = vector.load %arg9[%c0_19, %c0_20] : memref<8x1xf32, #tpu.memory_space<vmem>>, vector<8x1xf32>
    %26 = arith.mulf %12, %12 : vector<8x32xf32>
    %cst_21 = arith.constant dense<0.000000e+00> : vector<8xf32>
    %27 = vector.multi_reduction <add>, %26, %cst_21 [1] : vector<8x32xf32> to vector<8xf32>
    %28 = vector.shape_cast %27 : vector<8xf32> to vector<8x1xf32>
    %29 = arith.addf %25, %28 : vector<8x1xf32>
    %c0_22 = arith.constant 0 : index
    %c0_23 = arith.constant 0 : index
    %30 = vector.load %arg9[%c0_22, %c0_23] : memref<8x1xf32, #tpu.memory_space<vmem>>, vector<8x1xf32>
    tpu.vector_store %arg9[%c0_22, %c0_23], %29 {strides = array<i32>} : memref<8x1xf32, #tpu.memory_space<vmem>>, vector<8x1xf32>,
    %c0_i32_24 = arith.constant 0 : i32
    %31 = arith.cmpi eq, %arg1, %c0_i32_24 : i32
    %32 = arith.extui %31 : i1 to i32
    %c0_i32_25 = arith.constant 0 : i32
    %33 = arith.cmpi ne, %32, %c0_i32_25 : i32
    scf.if %33 {
      %c0_26 = arith.constant 0 : index
      %c0_27 = arith.constant 0 : index
      %34 = vector.load %arg7[%c0_26, %c0_27] : memref<8x1xf32, #tpu.memory_space<vmem>>, vector<8x1xf32>
      %c0_28 = arith.constant 0 : index
      %c0_29 = arith.constant 0 : index
      %35 = vector.load %arg8[%c0_28, %c0_29] : memref<8x1xf32, #tpu.memory_space<vmem>>, vector<8x1xf32>
      %c0_30 = arith.constant 0 : index
      %c0_31 = arith.constant 0 : index
      %36 = vector.load %arg9[%c0_30, %c0_31] : memref<8x1xf32, #tpu.memory_space<vmem>>, vector<8x1xf32>
      %37 = arith.mulf %35, %36 : vector<8x1xf32>
      %cst_32 = arith.constant 1.000000e-24 : f32
      %38 = vector.broadcast %cst_32 : f32 to vector<8x1xf32>
      %39 = arith.maximumf %37, %38 : vector<8x1xf32>
      %40 = math.rsqrt %39 : vector<8x1xf32>
      %41 = arith.mulf %34, %40 : vector<8x1xf32>
      %c0_33 = arith.constant 0 : index
      %c0_34 = arith.constant 0 : index
      %42 = vector.load %arg6[%c0_33, %c0_34] : memref<8x1xf32, #tpu.memory_space<vmem>>, vector<8x1xf32>
      tpu.vector_store %arg6[%c0_33, %c0_34], %41 {strides = array<i32>} : memref<8x1xf32, #tpu.memory_space<vmem>>, vector<8x1xf32>,
    } else {
    }
    return
  }
  func.func @transform_0(%arg0: i32, %arg1: i32) -> (i32, i32) {
    %c0_i32 = arith.constant 0 : i32
    %c0_i32_0 = arith.constant 0 : i32
    return %arg0, %c0_i32 : i32, i32
  }
  func.func @transform_1(%arg0: i32, %arg1: i32) -> (i32, i32) {
    %c0_i32 = arith.constant 0 : i32
    %c0_i32_0 = arith.constant 0 : i32
    return %arg0, %c0_i32 : i32, i32
  }
  func.func @transform_2(%arg0: i32, %arg1: i32) -> (i32, i32) {
    %c0_i32 = arith.constant 0 : i32
    %c0_i32_0 = arith.constant 0 : i32
    return %c0_i32, %arg1 : i32, i32
  }
  func.func @transform_3(%arg0: i32, %arg1: i32) -> (i32, i32) {
    %c0_i32 = arith.constant 0 : i32
    %c0_i32_0 = arith.constant 0 : i32
    return %c0_i32, %arg1 : i32, i32
  }
  func.func @transform_4(%arg0: i32, %arg1: i32) -> (i32, i32) {
    %c0_i32 = arith.constant 0 : i32
    %c0_i32_0 = arith.constant 0 : i32
    return %arg0, %c0_i32 : i32, i32
  }
}

</mosaic_0001>

<llo_original>
// kernel: tpu_custom_call.1
$region0: #{tpu_custom_call.1}
  #allocation0 [shape = 'u32[]', space=smem, size = 0x4, offset = 0x4, fixed_abs, tag = 'smem constant byte address 0x4 - core index']
  #allocation1 [shape = 'u32[72,128]{1,0:T(1,128)}', space=vmem, size = 0x9000, scoped, tag = 'internal scratch']
  #allocation2 [shape = 'f32[8,1]{1,0:T(8,128)}', space=vmem, size = 0x1000, scoped, tag = 'scratch operand']
  #allocation3 [shape = 'f32[8,1]{1,0:T(8,128)}', space=vmem, size = 0x1000, scoped, tag = 'scratch operand']
  #allocation4 [shape = 'f32[8,1]{1,0:T(8,128)}', space=vmem, size = 0x1000, scoped, tag = 'scratch operand']
  %s0 = inlined_call_operand.hbm [shape: f32[8,32], index: 0, kind: input, shape index: {}]
  %s1 = inlined_call_operand.hbm [shape: f32[8,32], index: 1, kind: input, shape index: {}]
  %s2 = inlined_call_operand.hbm [shape: f32[32,32], index: 2, kind: input, shape index: {}]
  %s3 = inlined_call_operand.vmem [shape: f32[1,32], index: 3, kind: input, shape index: {}]
  %s4 = inlined_call_operand.vmem [shape: f32[8,1], index: 4, kind: output, shape index: {}]
  %s5 = sld [smem:[#allocation0]]
  $region46: #{tpu_custom_call.1} parent=0
    _
  %s7 = ssub.s32 1, %s5
  %s8 = scalar_select 0, %s7, %s5
  $region1: #{tpu_custom_call.1} parent=0
    #allocation5 [shape = 'u8[4096]{0}', space=vmem, size = 0x1000, scoped, tag = 'input window, operand 0, single buffered']
    #allocation6 [shape = 's32[1]{0}', space=sflag, size = 0x4, scoped, tag = 'scoped memory for tpu_custom_call.1']
    #allocation7 [shape = 'u8[4096]{0}', space=vmem, size = 0x1000, scoped, tag = 'input window, operand 1, single buffered']
    #allocation8 [shape = 's32[1]{0}', space=sflag, size = 0x4, scoped, tag = 'scoped memory for tpu_custom_call.1']
    #allocation9 [shape = 'u8[16384]{0}', space=vmem, size = 0x4000, scoped, tag = 'input window, operand 2, single buffered']
    %9 = vsyncpa [#allocation6], 0
    %10 = vsyncpa [#allocation8], 0
    // Predicated region
    $region2: #{tpu_custom_call.1} parent=1 // pred_check
      _
    $region3: #{tpu_custom_call.1} parent=1 // pred_check_branch
      %12 = sbr.rel (0) target = $region5
    $region4: #{tpu_custom_call.1} parent=1 // pred_region
      %14 = vsyncadd [#allocation6], 0
      %s16 = sshll.u32 %s0, 4
      %s17 = int_to_ptr.hbm [resolvable:$true] %s16
      %s18 = sshll.u32 [#allocation5], 4
      %s19 = int_to_ptr.vmem [resolvable:$true] %s18
      %21 = dma.hbm_to_vmem [thread:$0]  %s17, 128, %s19, [#allocation6]
    $region5: #{tpu_custom_call.1} parent=1 // pred_fallthru
      _
    // Predicated region
    $region6: #{tpu_custom_call.1} parent=1 // pred_check
      _
    $region7: #{tpu_custom_call.1} parent=1 // pred_check_branch
      %23 = sbr.rel (0) target = $region9
    $region8: #{tpu_custom_call.1} parent=1 // pred_region
      %25 = vsyncadd [#allocation8], 0
      %s27 = sshll.u32 %s1, 4
      %s28 = int_to_ptr.hbm [resolvable:$true] %s27
      %s29 = sshll.u32 [#allocation7], 4
      %s30 = int_to_ptr.vmem [resolvable:$true] %s29
      %32 = dma.hbm_to_vmem [thread:$0]  %s28, 128, %s30, [#allocation8]
    $region9: #{tpu_custom_call.1} parent=1 // pred_fallthru
      _
    // Predicated region
    $region10: #{tpu_custom_call.1} parent=1 // pred_check
      _
    $region11: #{tpu_custom_call.1} parent=1 // pred_check_branch
      %34 = sbr.rel (0) target = $region13
    $region12: #{tpu_custom_call.1} parent=1 // pred_region
      %36 = vsyncadd [#allocation8], 0
      %s37 = sshll.u32 %s2, 4
      %s38 = int_to_ptr.hbm [resolvable:$true] %s37
      %s39 = sshll.u32 [#allocation9], 4
      %s40 = int_to_ptr.vmem [resolvable:$true] %s39
      %45 = dma.hbm_to_vmem [thread:$0]  %s38, 512, %s40, [#allocation8], 128, 128, 8
    $region13: #{tpu_custom_call.1} parent=1 // pred_fallthru
      _
    // Predicated region
    $region14: #{tpu_custom_call.1} parent=1 // pred_check
      _
    $region15: #{tpu_custom_call.1} parent=1 // pred_check_branch
      %47 = sbr.rel (0) target = $region17
    $region16: #{tpu_custom_call.1} parent=1 // pred_region
      _
    $region17: #{tpu_custom_call.1} parent=1 // pred_fallthru
      _
    // Predicated region
    $region18: #{tpu_custom_call.1} parent=1 // pred_check
      _
    $region19: #{tpu_custom_call.1} parent=1 // pred_check_branch
      %49 = sbr.rel (0) target = $region21
    $region20: #{tpu_custom_call.1} parent=1 // pred_region
      %51 = dma.done [#allocation6], 128
    $region21: #{tpu_custom_call.1} parent=1 // pred_fallthru
      _
    // Predicated region
    $region22: #{tpu_custom_call.1} parent=1 // pred_check
      _
    $region23: #{tpu_custom_call.1} parent=1 // pred_check_branch
      %53 = sbr.rel (0) target = $region25
    $region24: #{tpu_custom_call.1} parent=1 // pred_region
      %55 = dma.done [#allocation8], 128
    $region25: #{tpu_custom_call.1} parent=1 // pred_fallthru
      _
    // Predicated region
    $region26: #{tpu_custom_call.1} parent=1 // pred_check
      _
    $region27: #{tpu_custom_call.1} parent=1 // pred_check_branch
      %57 = sbr.rel (0) target = $region29
    $region28: #{tpu_custom_call.1} parent=1 // pred_region
      %59 = dma.done [#allocation8], 512
    $region29: #{tpu_custom_call.1} parent=1 // pred_fallthru
      _
    %p60 = scmp.eq.s32.totalorder 0, 0
    // Predicated region
    $region30: #{tpu_custom_call.1} parent=1 // pred_check
      %p61 = pneg %p60
    $region31: #{tpu_custom_call.1} parent=1 // pred_check_branch
      %63 = sbr.rel (%p61) target = $region33
    $region32: #{tpu_custom_call.1} parent=1 // pred_region
      %vm64 = vcmask 7168
      %65 = vst.msk [vmem:[#allocation2] sm:$0xff] %vm64, 0.0
      %66 = vst.msk [vmem:[#allocation3] sm:$0xff] %vm64, 0.0
      %67 = vst.msk [vmem:[#allocation4] sm:$0xff] %vm64, 0.0
    $region33: #{tpu_custom_call.1} parent=1 // pred_fallthru
      _
    %v68 = vld [vmem:[#allocation9] sm:$0xff]
    %v69 = vld [vmem:[#allocation9 + $0x8] sm:$0xff]
    %v70 = vld [vmem:[#allocation9 + $0x10] sm:$0xff]
    %v71 = vld [vmem:[#allocation9 + $0x18] sm:$0xff]
    %v72 = vld [vmem:[%s3] sm:$0x1]
    %v73 = vld [vmem:[#allocation5] sm:$0xff]
    %v74 = vld [vmem:[#allocation7] sm:$0xff]
    %v76 = vperm.slane %v72, 0
    %vm78 = vcmask 261120
    %v80 = vsel %vm78, %v73, 0
    %82 = vmatpush.msra.mxu0 0.0
    %83 = vmatpush.msra.mxu0 0.0
    %84 = vmatpush.msra.mxu0 0.0
    %85 = vmatpush.msra.mxu0 0.0
    %86 = vmatpush.msra.mxu0 0.0
    %87 = vmatpush.msra.mxu0 0.0
    %88 = vmatpush.msra.mxu0 0.0
    %89 = vmatpush.msra.mxu0 0.0
    %90 = vmatpush.msra.mxu0 0.0
    %91 = vmatpush.msra.mxu0 0.0
    %92 = vmatpush.msra.mxu0 0.0
    %93 = vmatpush.msra.mxu0 0.0
    %94 = vmatpush.msra.mxu0 %v71
    %95 = vmatpush.msra.mxu0 %v70
    %96 = vmatpush.msra.mxu0 %v69
    %97 = vmatpush.msra.mxu0 %v68
    %98 = vmatmul.f32.gmra.mxu0 %v80
    %v99 = vpop.f32.mrf.mxu0
    %v100 = vadd.f32 %v76, %v99
    %101 = vdwg.mxu0
    %v103 = vsel %vm78, %v74, 0
    %105 = vmatpush.msra.mxu0 0.0
    %106 = vmatpush.msra.mxu0 0.0
    %107 = vmatpush.msra.mxu0 0.0
    %108 = vmatpush.msra.mxu0 0.0
    %109 = vmatpush.msra.mxu0 0.0
    %110 = vmatpush.msra.mxu0 0.0
    %111 = vmatpush.msra.mxu0 0.0
    %112 = vmatpush.msra.mxu0 0.0
    %113 = vmatpush.msra.mxu0 0.0
    %114 = vmatpush.msra.mxu0 0.0
    %115 = vmatpush.msra.mxu0 0.0
    %116 = vmatpush.msra.mxu0 0.0
    %117 = vmatpush.msra.mxu0 %v71
    %118 = vmatpush.msra.mxu0 %v70
    %119 = vmatpush.msra.mxu0 %v69
    %120 = vmatpush.msra.mxu0 %v68
    %121 = vmatmul.f32.gmra.mxu0 %v103
    %v122 = vpop.f32.mrf.mxu0
    %v123 = vadd.f32 %v76, %v122
    %124 = vdwg.mxu0
    %v125 = vld [vmem:[#allocation2] sm:$0xff]
    %v126 = vmul.f32 %v100, %v123
    %v127 = vsel %vm78, %v126, 0.0
    %128 = vadd.xlane.f32.xlu0 %v127
    %v129 = vpop.xlane.xlu0 %128
    %v130 = vadd.f32 %v125, %v129
    %vm131 = vcmask 7168
    %132 = vst.msk [vmem:[#allocation2] sm:$0xff] %vm131, %v130
    %v133 = vld [vmem:[#allocation3] sm:$0xff]
    %v134 = vmul.f32 %v100, %v100
    %v135 = vsel %vm78, %v134, 0.0
    %136 = vadd.xlane.f32.xlu0 %v135
    %v137 = vpop.xlane.xlu0 %136
    %v138 = vadd.f32 %v133, %v137
    %139 = vst.msk [vmem:[#allocation3] sm:$0xff] %vm131, %v138
    %v140 = vld [vmem:[#allocation4] sm:$0xff]
    %v141 = vmul.f32 %v123, %v123
    %v142 = vsel %vm78, %v141, 0.0
    %143 = vadd.xlane.f32.xlu0 %v142
    %v144 = vpop.xlane.xlu0 %143
    %v145 = vadd.f32 %v140, %v144
    %146 = vst.msk [vmem:[#allocation4] sm:$0xff] %vm131, %v145
    // Predicated region
    $region34: #{tpu_custom_call.1} parent=1 // pred_check
      %p147 = pneg %p60
    $region35: #{tpu_custom_call.1} parent=1 // pred_check_branch
      %149 = sbr.rel (%p147) target = $region37
    $region36: #{tpu_custom_call.1} parent=1 // pred_region
      %v150 = vld [vmem:[#allocation2] sm:$0xff]
      %v151 = vld [vmem:[#allocation3] sm:$0xff]
      %v152 = vld [vmem:[#allocation4] sm:$0xff]
      %v153 = vmul.f32 %v151, %v152
      %v154 = vmax.f32 %v153, 1e-24
      %v155 = vrsqrt.pop %v154
      %v156 = vmul.f32 %v155, %v154
      %v157 = vmul.f32 %v156, %v155
      %v158 = vmul.f32 0.5, %v157
      %v159 = vsub.f32 1.5, %v158
      %v160 = vmul.f32 %v155, %v159
      %vm161 = vweird.f32 %v154
      %vm162 = vweird.f32 %v155
      %vm163 = vmor %vm161, %vm162
      %v164 = vsel %vm163, %v155, %v160
      %v165 = vmul.f32 %v150, %v164
      %166 = vst.msk [vmem:[%s4] sm:$0xff] %vm131, %v165
    $region37: #{tpu_custom_call.1} parent=1 // pred_fallthru
      _
    // Predicated region
    $region38: #{tpu_custom_call.1} parent=1 // pred_check
      _
    $region39: #{tpu_custom_call.1} parent=1 // pred_check_branch
      %168 = sbr.rel (0) target = $region41
    $region40: #{tpu_custom_call.1} parent=1 // pred_region
      _
    $region41: #{tpu_custom_call.1} parent=1 // pred_fallthru
      _
    // Predicated region
    $region42: #{tpu_custom_call.1} parent=1 // pred_check
      _
    $region43: #{tpu_custom_call.1} parent=1 // pred_check_branch
      %170 = sbr.rel (0) target = $region45
    $region44: #{tpu_custom_call.1} parent=1 // pred_region
      _
    $region45: #{tpu_custom_call.1} parent=1 // pred_fallthru
      _
    %171 = vsyncpa [#allocation6], 1
    %172 = vsyncpa [#allocation8], 1

// kernel: tpu_custom_call.1
$region0: #{tpu_custom_call.1}
  #allocation0 [shape = 'u32[]', space=smem, size = 0x4, offset = 0x4, fixed_abs, tag = 'smem constant byte address 0x4 - core index']
  #allocation1 [shape = 'u32[72,128]{1,0:T(1,128)}', space=vmem, size = 0x9000, scoped, tag = 'internal scratch']
  #allocation2 [shape = 'f32[8,1]{1,0:T(8,128)}', space=vmem, size = 0x1000, scoped, tag = 'scratch operand']
  #allocation3 [shape = 'f32[8,1]{1,0:T(8,128)}', space=vmem, size = 0x1000, scoped, tag = 'scratch operand']
  #allocation4 [shape = 'f32[8,1]{1,0:T(8,128)}', space=vmem, size = 0x1000, scoped, tag = 'scratch operand']
  %s0 = inlined_call_operand.hbm [shape: f32[8,32], index: 0, kind: input, shape index: {}]
  %s1 = inlined_call_operand.hbm [shape: f32[8,32], index: 1, kind: input, shape index: {}]
  %s2 = inlined_call_operand.hbm [shape: f32[32,32], index: 2, kind: input, shape index: {}]
  %s3 = inlined_call_operand.vmem [shape: f32[1,32], index: 3, kind: input, shape index: {}]
  %s4 = inlined_call_operand.vmem [shape: f32[8,1], index: 4, kind: output, shape index: {}]
  %s5 = sld [smem:[#allocation0]]
  $region46: #{tpu_custom_call.1} parent=0
    _
  %s7 = ssub.s32 1, %s5
  %s8 = scalar_select 0, %s7, %s5
  $region1: #{tpu_custom_call.1} parent=0
    #allocation5 [shape = 'u8[4096]{0}', space=vmem, size = 0x1000, scoped, tag = 'input window, operand 0, single buffered']
    #allocation6 [shape = 's32[1]{0}', space=sflag, size = 0x4, scoped, tag = 'scoped memory for tpu_custom_call.1']
    #allocation7 [shape = 'u8[4096]{0}', space=vmem, size = 0x1000, scoped, tag = 'input window, operand 1, single buffered']
    #allocation8 [shape = 's32[1]{0}', space=sflag, size = 0x4, scoped, tag = 'scoped memory for tpu_custom_call.1']
    #allocation9 [shape = 'u8[16384]{0}', space=vmem, size = 0x4000, scoped, tag = 'input window, operand 2, single buffered']
    %9 = vsyncpa [#allocation6], 0
    %10 = vsyncpa [#allocation8], 0
    // Predicated region
    $region2: #{tpu_custom_call.1} parent=1 // pred_check
      _
    $region3: #{tpu_custom_call.1} parent=1 // pred_check_branch
      %12 = sbr.rel (0) target = $region5
    $region4: #{tpu_custom_call.1} parent=1 // pred_region
      %14 = vsyncadd [#allocation6], 0
      %s16 = sshll.u32 %s0, 4
      %s17 = int_to_ptr.hbm [resolvable:$true] %s16
      %s18 = sshll.u32 [#allocation5], 4
      %s19 = int_to_ptr.vmem [resolvable:$true] %s18
      %21 = dma.hbm_to_vmem [thread:$0]  %s17, 128, %s19, [#allocation6]
    $region5: #{tpu_custom_call.1} parent=1 // pred_fallthru
      _
    // Predicated region
    $region6: #{tpu_custom_call.1} parent=1 // pred_check
      _
    $region7: #{tpu_custom_call.1} parent=1 // pred_check_branch
      %23 = sbr.rel (0) target = $region9
    $region8: #{tpu_custom_call.1} parent=1 // pred_region
      %25 = vsyncadd [#allocation8], 0
      %s27 = sshll.u32 %s1, 4
      %s28 = int_to_ptr.hbm [resolvable:$true] %s27
      %s29 = sshll.u32 [#allocation7], 4
      %s30 = int_to_ptr.vmem [resolvable:$true] %s29
      %32 = dma.hbm_to_vmem [thread:$0]  %s28, 128, %s30, [#allocation8]
    $region9: #{tpu_custom_call.1} parent=1 // pred_fallthru
      _
    // Predicated region
    $region10: #{tpu_custom_call.1} parent=1 // pred_check
      _
    $region11: #{tpu_custom_call.1} parent=1 // pred_check_branch
      %34 = sbr.rel (0) target = $region13
    $region12: #{tpu_custom_call.1} parent=1 // pred_region
      %36 = vsyncadd [#allocation8], 0
      %s37 = sshll.u32 %s2, 4
      %s38 = int_to_ptr.hbm [resolvable:$true] %s37
      %s39 = sshll.u32 [#allocation9], 4
      %s40 = int_to_ptr.vmem [resolvable:$true] %s39
      %45 = dma.hbm_to_vmem [thread:$0]  %s38, 512, %s40, [#allocation8], 128, 128, 8
    $region13: #{tpu_custom_call.1} parent=1 // pred_fallthru
      _
    // Predicated region
    $region14: #{tpu_custom_call.1} parent=1 // pred_check
      _
    $region15: #{tpu_custom_call.1} parent=1 // pred_check_branch
      %47 = sbr.rel (0) target = $region17
    $region16: #{tpu_custom_call.1} parent=1 // pred_region
      _
    $region17: #{tpu_custom_call.1} parent=1 // pred_fallthru
      _
    // Predicated region
    $region18: #{tpu_custom_call.1} parent=1 // pred_check
      _
    $region19: #{tpu_custom_call.1} parent=1 // pred_check_branch
      %49 = sbr.rel (0) target = $region21
    $region20: #{tpu_custom_call.1} parent=1 // pred_region
      %51 = dma.done [#allocation6], 128
    $region21: #{tpu_custom_call.1} parent=1 // pred_fallthru
      _
    // Predicated region
    $region22: #{tpu_custom_call.1} parent=1 // pred_check
      _
    $region23: #{tpu_custom_call.1} parent=1 // pred_check_branch
      %53 = sbr.rel (0) target = $region25
    $region24: #{tpu_custom_call.1} parent=1 // pred_region
      %55 = dma.done [#allocation8], 128
    $region25: #{tpu_custom_call.1} parent=1 // pred_fallthru
      _
    // Predicated region
    $region26: #{tpu_custom_call.1} parent=1 // pred_check
      _
    $region27: #{tpu_custom_call.1} parent=1 // pred_check_branch
      %57 = sbr.rel (0) target = $region29
    $region28: #{tpu_custom_call.1} parent=1 // pred_region
      %59 = dma.done [#allocation8], 512
    $region29: #{tpu_custom_call.1} parent=1 // pred_fallthru
      _
    %p60 = scmp.eq.s32.totalorder 0, 0
    // Predicated region
    $region30: #{tpu_custom_call.1} parent=1 // pred_check
      %p61 = pneg %p60
    $region31: #{tpu_custom_call.1} parent=1 // pred_check_branch
      %63 = sbr.rel (%p61) target = $region33
    $region32: #{tpu_custom_call.1} parent=1 // pred_region
      %vm64 = vcmask 7168
      %65 = vst.msk [vmem:[#allocation2] sm:$0xff] %vm64, 0.0
      %66 = vst.msk [vmem:[#allocation3] sm:$0xff] %vm64, 0.0
      %67 = vst.msk [vmem:[#allocation4] sm:$0xff] %vm64, 0.0
    $region33: #{tpu_custom_call.1} parent=1 // pred_fallthru
      _
    %v68 = vld [vmem:[#allocation9] sm:$0xff]
    %v69 = vld [vmem:[#allocation9 + $0x8] sm:$0xff]
    %v70 = vld [vmem:[#allocation9 + $0x10] sm:$0xff]
    %v71 = vld [vmem:[#allocation9 + $0x18] sm:$0xff]
    %v72 = vld [vmem:[%s3] sm:$0x1]
    %v73 = vld [vmem:[#allocation5] sm:$0xff]
    %v74 = vld [vmem:[#allocation7] sm:$0xff]
    %v76 = vperm.slane %v72, 0
    %vm78 = vcmask 261120
    %v80 = vsel %vm78, %v73, 0
    %82 = vmatpush.msra.mxu0 0.0
    %83 = vmatpush.msra.mxu0 0.0
    %84 = vmatpush.msra.mxu0 0.0
    %85 = vmatpush.msra.mxu0 0.0
    %86 = vmatpush.msra.mxu0 0.0
    %87 = vmatpush.msra.mxu0 0.0
    %88 = vmatpush.msra.mxu0 0.0
    %89 = vmatpush.msra.mxu0 0.0
    %90 = vmatpush.msra.mxu0 0.0
    %91 = vmatpush.msra.mxu0 0.0
    %92 = vmatpush.msra.mxu0 0.0
    %93 = vmatpush.msra.mxu0 0.0
    %94 = vmatpush.msra.mxu0 %v71
    %95 = vmatpush.msra.mxu0 %v70
    %96 = vmatpush.msra.mxu0 %v69
    %97 = vmatpush.msra.mxu0 %v68
    %98 = vmatmul.f32.gmra.mxu0 %v80
    %v99 = vpop.f32.mrf.mxu0
    %v100 = vadd.f32 %v76, %v99
    %101 = vdwg.mxu0
    %v103 = vsel %vm78, %v74, 0
    %105 = vmatpush.msra.mxu0 0.0
    %106 = vmatpush.msra.mxu0 0.0
    %107 = vmatpush.msra.mxu0 0.0
    %108 = vmatpush.msra.mxu0 0.0
    %109 = vmatpush.msra.mxu0 0.0
    %110 = vmatpush.msra.mxu0 0.0
    %111 = vmatpush.msra.mxu0 0.0
    %112 = vmatpush.msra.mxu0 0.0
    %113 = vmatpush.msra.mxu0 0.0
    %114 = vmatpush.msra.mxu0 0.0
    %115 = vmatpush.msra.mxu0 0.0
    %116 = vmatpush.msra.mxu0 0.0
    %117 = vmatpush.msra.mxu0 %v71
    %118 = vmatpush.msra.mxu0 %v70
    %119 = vmatpush.msra.mxu0 %v69
    %120 = vmatpush.msra.mxu0 %v68
    %121 = vmatmul.f32.gmra.mxu0 %v103
    %v122 = vpop.f32.mrf.mxu0
    %v123 = vadd.f32 %v76, %v122
    %124 = vdwg.mxu0
    %v125 = vld [vmem:[#allocation2] sm:$0xff]
    %v126 = vmul.f32 %v100, %v123
    %v127 = vsel %vm78, %v126, 0.0
    %128 = vadd.xlane.f32.xlu0 %v127
    %v129 = vpop.xlane.xlu0 %128
    %v130 = vadd.f32 %v125, %v129
    %vm131 = vcmask 7168
    %132 = vst.msk [vmem:[#allocation2] sm:$0xff] %vm131, %v130
    %v133 = vld [vmem:[#allocation3] sm:$0xff]
    %v134 = vmul.f32 %v100, %v100
    %v135 = vsel %vm78, %v134, 0.0
    %136 = vadd.xlane.f32.xlu0 %v135
    %v137 = vpop.xlane.xlu0 %136
    %v138 = vadd.f32 %v133, %v137
    %139 = vst.msk [vmem:[#allocation3] sm:$0xff] %vm131, %v138
    %v140 = vld [vmem:[#allocation4] sm:$0xff]
    %v141 = vmul.f32 %v123, %v123
    %v142 = vsel %vm78, %v141, 0.0
    %143 = vadd.xlane.f32.xlu0 %v142
    %v144 = vpop.xlane.xlu0 %143
    %v145 = vadd.f32 %v140, %v144
    %146 = vst.msk [vmem:[#allocation4] sm:$0xff] %vm131, %v145
    // Predicated region
    $region34: #{tpu_custom_call.1} parent=1 // pred_check
      %p147 = pneg %p60
    $region35: #{tpu_custom_call.1} parent=1 // pred_check_branch
      %149 = sbr.rel (%p147) target = $region37
    $region36: #{tpu_custom_call.1} parent=1 // pred_region
      %v150 = vld [vmem:[#allocation2] sm:$0xff]
      %v151 = vld [vmem:[#allocation3] sm:$0xff]
      %v152 = vld [vmem:[#allocation4] sm:$0xff]
      %v153 = vmul.f32 %v151, %v152
      %v154 = vmax.f32 %v153, 1e-24
      %v155 = vrsqrt.pop %v154
      %v156 = vmul.f32 %v155, %v154
      %v157 = vmul.f32 %v156, %v155
      %v158 = vmul.f32 0.5, %v157
      %v159 = vsub.f32 1.5, %v158
      %v160 = vmul.f32 %v155, %v159
      %vm161 = vweird.f32 %v154
      %vm162 = vweird.f32 %v155
      %vm163 = vmor %vm161, %vm162
      %v164 = vsel %vm163, %v155, %v160
      %v165 = vmul.f32 %v150, %v164
      %166 = vst.msk [vmem:[%s4] sm:$0xff] %vm131, %v165
    $region37: #{tpu_custom_call.1} parent=1 // pred_fallthru
      _
    // Predicated region
    $region38: #{tpu_custom_call.1} parent=1 // pred_check
      _
    $region39: #{tpu_custom_call.1} parent=1 // pred_check_branch
      %168 = sbr.rel (0) target = $region41
    $region40: #{tpu_custom_call.1} parent=1 // pred_region
      _
    $region41: #{tpu_custom_call.1} parent=1 // pred_fallthru
      _
    // Predicated region
    $region42: #{tpu_custom_call.1} parent=1 // pred_check
      _
    $region43: #{tpu_custom_call.1} parent=1 // pred_check_branch
      %170 = sbr.rel (0) target = $region45
    $region44: #{tpu_custom_call.1} parent=1 // pred_region
      _
    $region45: #{tpu_custom_call.1} parent=1 // pred_fallthru
      _
    %171 = vsyncpa [#allocation6], 1
    %172 = vsyncpa [#allocation8], 1

</llo_original>
